<compile_context>
chip_gen: v5e
topology: v5e:2x2
jax: 0.10.0
libtpu: 0.0.40
codegen_flags: <defaults>
</compile_context>

<pallas_src>
import numpy as np

import jax
import jax.numpy as jnp
from jax import lax
from jax.experimental import pallas as pl
from jax.experimental.pallas import tpu as pltpu

EPS = 1e-5  # PyTorch BatchNorm default eps


# ----------------------------------------------------------------------------
# pltpu.roll rotation-convention probe (one-time, on device)
# ----------------------------------------------------------------------------
_ROLL_MATCHES_NUMPY = None


def _pltpu_roll_matches_numpy():
    """Probe whether pltpu.roll follows np.roll semantics (out[i] = x[i - shift]).

    The depthwise tap shifts below are derived from this, so they stay correct
    regardless of the rotation convention of the installed compiler."""
    global _ROLL_MATCHES_NUMPY
    if _ROLL_MATCHES_NUMPY is None:
        def probe(x_ref, o_ref):
            o_ref[...] = pltpu.roll(x_ref[...], 1, 1)

        with jax.ensure_compile_time_eval():
            x = jnp.arange(8 * 128, dtype=jnp.int32).reshape(8, 128)
            y = pl.pallas_call(
                probe, out_shape=jax.ShapeDtypeStruct((8, 128), jnp.int32))(x)
            # np.roll convention: y[0, 1] == x[0, 0] == 0
            _ROLL_MATCHES_NUMPY = bool(int(y[0, 1]) == 0)
    return _ROLL_MATCHES_NUMPY


# ----------------------------------------------------------------------------
# Fused GhostDoubleConv kernel
# ----------------------------------------------------------------------------
def _make_ghost_double_conv_kernel(V, offsets, roll_matches_numpy, cmid_b):
    # We need rolled[v] == x[v + off].  np.roll convention: out[v] = x[v - s]
    # => s = -off (mod V).  Opposite convention => s = off (mod V).
    shifts = [(((-off) % V) if roll_matches_numpy else (off % V))
              for off in offsets]

    def kernel(x_ref, w1a_ref, b1a_ref, c2a_ref, b2a_ref,
               w1b_ref, b1b_ref, c2b_ref, b2b_ref, o_ref):

        def pointwise(parts, w1, b1):
            # 1x1x1 conv + folded BN + ReLU as VPU FMAs over input channels
            # (channel counts are 4..8: far too small for the MXU).
            acc = None
            col = 0
            for p in parts:
                for i in range(p.shape[0]):
                    term = p[i:i + 1, :] * w1[:, col:col + 1]    # (Cmid, V)
                    acc = term if acc is None else acc + term
                    col += 1
            return jnp.maximum(acc + b1, 0.0)

        def depthwise(x1, coef_ref, b2):
            # Depthwise 3x3x3 conv + folded BN + ReLU: 26 lane rotations (XLU,
            # off the VPU-critical path) and one multiply-add per tap against a
            # pre-folded (weight x halo-mask) coefficient tile.  Accumulator is
            # initialised by the first tap (no zero-fill).
            acc = None
            for tap, shift in enumerate(shifts):
                rolled = x1 if shift == 0 else pltpu.roll(x1, shift, 1)
                term = rolled * coef_ref[tap]                    # (Cmid, V)
                acc = term if acc is None else acc + term
            return jnp.maximum(acc + b2, 0.0)

        x = x_ref[0]                                             # (Cin, V)
        # Ghost module #1
        x1a = pointwise([x], w1a_ref[...], b1a_ref[...])
        x2a = depthwise(x1a, c2a_ref, b2a_ref[...])
        # Ghost module #2 consumes concat([x1a, x2a]); keep the concat virtual
        # (both halves stay resident in VMEM / vregs).
        x1b = pointwise([x1a, x2a], w1b_ref[...], b1b_ref[...])
        x2b = depthwise(x1b, c2b_ref, b2b_ref[...])
        o_ref[0, :cmid_b, :] = x1b                               # "concat" ==
        o_ref[0, cmid_b:, :] = x2b                               # disjoint slices

    return kernel


# ----------------------------------------------------------------------------
# Host-side helpers (parameter folding, tap coefficients, plumbing)
# ----------------------------------------------------------------------------
def _fold_bn(bn):
    scale = bn["gamma"] / jnp.sqrt(bn["var"] + EPS)
    bias = bn["beta"] - bn["mean"] * scale
    return scale, bias


def _tap_offsets_and_masks(D, H, W):
    """Per-tap flattened-voxel offsets and (27, D*H*W) f32 halo-validity masks.

    Tap order is kd*9 + kh*3 + kw (matches the Conv3d weight layout)."""
    HW = H * W
    d = np.arange(D).reshape(D, 1, 1)
    h = np.arange(H).reshape(1, H, 1)
    w = np.arange(W).reshape(1, 1, W)
    offsets, masks = [], []
    for kd in range(3):
        for kh in range(3):
            for kw in range(3):
                dd, dh, dw = kd - 1, kh - 1, kw - 1
                offsets.append(dd * HW + dh * W + dw)
                m = np.ones((D, H, W), np.float32)
                if dd == -1:
                    m = m * (d >= 1)
                if dd == +1:
                    m = m * (d <= D - 2)
                if dh == -1:
                    m = m * (h >= 1)
                if dh == +1:
                    m = m * (h <= H - 2)
                if dw == -1:
                    m = m * (w >= 1)
                if dw == +1:
                    m = m * (w <= W - 2)
                masks.append(m.reshape(-1))
    return offsets, np.stack(masks).astype(np.float32)


def _fold_module_params(p, tap_masks):
    """Fold eval-mode BN into the bias-free convs; return kernel-layout params.

    Returns (w1, b1, coef, b2) where coef[tap] = dw_weight[:, tap] x halo_mask,
    i.e. the whole depthwise tap term collapses to one multiply in-kernel."""
    cmid = p["pw_w"].shape[0]
    s1, b1 = _fold_bn(p["bn1"])
    w1 = p["pw_w"][:, :, 0, 0, 0] * s1[:, None]                  # (Cmid, Cin)
    s2, b2 = _fold_bn(p["bn2"])
    w2 = p["dw_w"][:, 0].reshape(cmid, 27) * s2[:, None]         # (Cmid, 27)
    masks = jnp.asarray(tap_masks)                               # (27, V)
    coef = jnp.transpose(w2)[:, :, None] * masks[:, None, :]     # (27, Cmid, V)
    return (w1.astype(jnp.float32),
            b1.reshape(cmid, 1).astype(jnp.float32),
            coef.astype(jnp.float32),
            b2.reshape(cmid, 1).astype(jnp.float32))


def _zero_index_map(ndim):
    return lambda n: (0,) * ndim


# ----------------------------------------------------------------------------
# Public forward (Pallas-backed, single fused pallas_call)
# ----------------------------------------------------------------------------
def ghost_double_conv_forward(x_ncdhw, params1, params2):
    """GhostDoubleConv forward.  x: (N, Cin, D, H, W) -> (N, Cout, D, H, W)."""
    N, Cin, D, H, W = x_ncdhw.shape
    V = D * H * W

    offsets, tap_masks = _tap_offsets_and_masks(D, H, W)
    w1a, b1a, c2a, b2a = _fold_module_params(params1, tap_masks)
    w1b, b1b, c2b, b2b = _fold_module_params(params2, tap_masks)
    assert w1a.shape[1] == Cin, "module-1 in_channels mismatch"
    assert w1b.shape[1] == 2 * w1a.shape[0], "module-2 in_channels mismatch"
    cmid_b = w1b.shape[0]
    cout = 2 * cmid_b

    # NCDHW is already voxel-minor: flattening D*H*W into the lane axis is free.
    x_flat = x_ncdhw.reshape(N, Cin, V).astype(jnp.float32)

    kernel = _make_ghost_double_conv_kernel(
        V, offsets, _pltpu_roll_matches_numpy(), cmid_b)

    weights = (w1a, b1a, c2a, b2a, w1b, b1b, c2b, b2b)
    # Constant operands: block index is always 0, so the pipeline DMAs them once
    # and keeps them resident across the batch grid.
    const_specs = [pl.BlockSpec(a.shape, _zero_index_map(a.ndim))
                   for a in weights]

    out = pl.pallas_call(
        kernel,
        out_shape=jax.ShapeDtypeStruct((N, cout, V), jnp.float32),
        grid_spec=pltpu.PrefetchScalarGridSpec(
            num_scalar_prefetch=0,
            grid=(N,),                                           # one block per image
            in_specs=[pl.BlockSpec((1, Cin, V), lambda n: (n, 0, 0))] + const_specs,
            out_specs=pl.BlockSpec((1, cout, V), lambda n: (n, 0, 0)),
        ),
        compiler_params=pltpu.CompilerParams(
            dimension_semantics=("parallel",),                   # megacore on v7x
            vmem_limit_bytes=32 * 1024 * 1024,
        ),
    )(x_flat, *weights)
    return out.reshape(N, cout, D, H, W)


# ----------------------------------------------------------------------------
# Parameter setup (deterministic, mirrors the PyTorch module's shapes)
# ----------------------------------------------------------------------------
def _init_bn(key, c):
    k1, k2, k3, k4 = jax.random.split(key, 4)
    return dict(
        gamma=jax.random.uniform(k1, (c,), minval=0.5, maxval=1.5),
        beta=0.1 * jax.random.normal(k2, (c,)),
        mean=0.1 * jax.random.normal(k3, (c,)),
        var=jax.random.uniform(k4, (c,), minval=0.5, maxval=1.5),
    )


def init_ghost_module(key, cin, cout):
    cmid = cout // 2
    k1, k2, k3, k4 = jax.random.split(key, 4)
    return dict(
        # PyTorch Conv3d weight layouts: (O, I, kD, kH, kW)
        pw_w=0.2 * jax.random.normal(k1, (cmid, cin, 1, 1, 1)),
        dw_w=0.2 * jax.random.normal(k2, (cmid, 1, 3, 3, 3)),
        bn1=_init_bn(k3, cmid),
        bn2=_init_bn(k4, cmid),
    )


# ----------------------------------------------------------------------------
# Pure-JAX reference (correctness check only)
# ----------------------------------------------------------------------------
def _ref_ghost_module(x_ndhwc, params):
    s1, b1 = _fold_bn(params["bn1"])
    w = jnp.transpose(params["pw_w"], (2, 3, 4, 1, 0))   # (1,1,1,Cin,Cmid)
    y = lax.conv_general_dilated(
        x_ndhwc, w, (1, 1, 1), "VALID",
        dimension_numbers=("NDHWC", "DHWIO", "NDHWC"),
        precision=lax.Precision.HIGHEST)
    x1 = jnp.maximum(y * s1 + b1, 0.0)

    s2, b2 = _fold_bn(params["bn2"])
    dw = jnp.transpose(params["dw_w"], (2, 3, 4, 1, 0))  # (3,3,3,1,Cmid)
    y2 = lax.conv_general_dilated(
        x1, dw, (1, 1, 1), "SAME",
        dimension_numbers=("NDHWC", "DHWIO", "NDHWC"),
        feature_group_count=params["dw_w"].shape[0],
        precision=lax.Precision.HIGHEST)
    x2 = jnp.maximum(y2 * s2 + b2, 0.0)
    return jnp.concatenate([x1, x2], axis=-1)


def _ref_forward(x_ncdhw, params1, params2):
    x = jnp.transpose(x_ncdhw, (0, 2, 3, 4, 1))
    x = _ref_ghost_module(x, params1)
    x = _ref_ghost_module(x, params2)
    return jnp.transpose(x, (0, 4, 1, 2, 3))


# ----------------------------------------------------------------------------
if __name__ == "__main__":
    key = jax.random.PRNGKey(0)
    kx, kp1, kp2 = jax.random.split(key, 3)

    N, Cin, D, H, W = 2, 4, 8, 8, 8
    Cout = 8

    x = jax.random.normal(kx, (N, Cin, D, H, W), dtype=jnp.float32)
    params1 = init_ghost_module(kp1, Cin, Cout)
    params2 = init_ghost_module(kp2, Cout, Cout)

    out = jax.block_until_ready(ghost_double_conv_forward(x, params1, params2))
    assert out.shape == (N, Cout, D, H, W), out.shape

    ref = jax.block_until_ready(_ref_forward(x, params1, params2))
    max_err = float(jnp.max(jnp.abs(out - ref)))
    assert jnp.allclose(out, ref, rtol=1e-4, atol=1e-4), max_err

    print("KERNEL_OK")
</pallas_src>

<mosaic_0001>
module attributes {stable_mosaic.version = 11 : i64} {
  func.func @probe(%arg0: memref<8x128xi32, #tpu.memory_space<vmem>>, %arg1: memref<8x128xi32, #tpu.memory_space<vmem>>) attributes {dimension_semantics = [], scalar_prefetch = 0 : i64, scratch_operands = 0 : i64, tpu.core_type = #tpu.core_type<tc>} {
    %c0 = arith.constant 0 : index
    %c0_0 = arith.constant 0 : index
    %0 = vector.load %arg0[%c0, %c0_0] : memref<8x128xi32, #tpu.memory_space<vmem>>, vector<8x128xi32>
    %c1_i32 = arith.constant 1 : i32
    %1 = tpu.dynamic_rotate %0 by %c1_i32 dim 1 : vector<8x128xi32>, i32 -> vector<8x128xi32>
    %c0_1 = arith.constant 0 : index
    %c0_2 = arith.constant 0 : index
    %2 = vector.load %arg1[%c0_1, %c0_2] : memref<8x128xi32, #tpu.memory_space<vmem>>, vector<8x128xi32>
    tpu.vector_store %arg1[%c0_1, %c0_2], %1 {strides = array<i32>} : memref<8x128xi32, #tpu.memory_space<vmem>>, vector<8x128xi32>,
    return
  }
}

</mosaic_0001>

<llo_original>
// kernel: tpu_custom_call.1
$region0: #{tpu_custom_call.1}
  #allocation0 [shape = 'u32[]', space=smem, size = 0x4, offset = 0x4, fixed_abs, tag = 'smem constant byte address 0x4 - core index']
  #allocation1 [shape = 'u32[72,128]{1,0:T(1,128)}', space=vmem, size = 0x9000, scoped, tag = 'internal scratch']
  %s0 = inlined_call_operand.hbm [shape: s32[8,128], index: 0, kind: input, shape index: {}]
  %s1 = inlined_call_operand.hbm [shape: s32[8,128], index: 1, kind: output, shape index: {}]
  %s2 = sld [smem:[#allocation0]]
  $region18: #{tpu_custom_call.1} parent=0
    _
  %s4 = ssub.s32 1, %s2
  %s5 = scalar_select 0, %s4, %s2
  $region1: #{tpu_custom_call.1} parent=0
    #allocation2 [shape = 'u8[4096]{0}', space=vmem, size = 0x1000, scoped, tag = 'input window, operand 0, single buffered']
    #allocation3 [shape = 's32[1]{0}', space=sflag, size = 0x4, scoped, tag = 'scoped memory for tpu_custom_call.1']
    #allocation4 [shape = 's32[1]{0}', space=sflag, size = 0x4, scoped, tag = 'scoped memory for tpu_custom_call.1']
    #allocation5 [shape = 'u8[4096]{0}', space=vmem, size = 0x1000, scoped, tag = 'output window, operand 0, single buffered']
    %6 = vsyncpa [#allocation3], 0
    %7 = vsyncpa [#allocation4], 0
    // Predicated region
    $region2: #{tpu_custom_call.1} parent=1 // pred_check
      _
    $region3: #{tpu_custom_call.1} parent=1 // pred_check_branch
      %9 = sbr.rel (0) target = $region5
    $region4: #{tpu_custom_call.1} parent=1 // pred_region
      %11 = vsyncadd [#allocation3], 0
      %s13 = sshll.u32 %s0, 4
      %s14 = int_to_ptr.hbm [resolvable:$true] %s13
      %s15 = sshll.u32 [#allocation2], 4
      %s16 = int_to_ptr.vmem [resolvable:$true] %s15
      %18 = dma.hbm_to_vmem [thread:$0]  %s14, 128, %s16, [#allocation3]
    $region5: #{tpu_custom_call.1} parent=1 // pred_fallthru
      _
    // Predicated region
    $region6: #{tpu_custom_call.1} parent=1 // pred_check
      _
    $region7: #{tpu_custom_call.1} parent=1 // pred_check_branch
      %20 = sbr.rel (0) target = $region9
    $region8: #{tpu_custom_call.1} parent=1 // pred_region
      %22 = dma.done [#allocation3], 128
    $region9: #{tpu_custom_call.1} parent=1 // pred_fallthru
      _
    %v23 = vld [vmem:[#allocation2] sm:$0xff]
    %24 = vrot.lane.b32.xlu0 %v23, 1
    %v25 = vpop.permute.xlu0 %24
    %26 = vst [vmem:[#allocation5] sm:$0xff] %v25
    // Predicated region
    $region10: #{tpu_custom_call.1} parent=1 // pred_check
      _
    $region11: #{tpu_custom_call.1} parent=1 // pred_check_branch
      %28 = sbr.rel (0) target = $region13
    $region12: #{tpu_custom_call.1} parent=1 // pred_region
      %30 = vsyncadd [#allocation4], 0
      %s32 = sshll.u32 [#allocation5], 4
      %s33 = int_to_ptr.vmem [resolvable:$true] %s32
      %s34 = sshll.u32 %s1, 4
      %s35 = int_to_ptr.hbm [resolvable:$true] %s34
      %37 = dma.vmem_to_hbm [thread:$0]  %s33, 128, %s35, [#allocation4]
    $region13: #{tpu_custom_call.1} parent=1 // pred_fallthru
      _
    // Predicated region
    $region14: #{tpu_custom_call.1} parent=1 // pred_check
      _
    $region15: #{tpu_custom_call.1} parent=1 // pred_check_branch
      %39 = sbr.rel (0) target = $region17
    $region16: #{tpu_custom_call.1} parent=1 // pred_region
      %41 = dma.done [#allocation4], 128
    $region17: #{tpu_custom_call.1} parent=1 // pred_fallthru
      _
    %42 = vsyncpa [#allocation3], 1
    %43 = vsyncpa [#allocation4], 1

</llo_original>
